<compile_context>
chip_gen: v7x
topology: tpu7x:2x2x1
jax: 0.10.0
libtpu: 0.0.40
codegen_flags: <defaults>
</compile_context>

<pallas_src>
import functools

import jax
import jax.numpy as jnp
from jax.experimental import pallas as pl
from jax.experimental.pallas import tpu as pltpu


# ---------------------------------------------------------------------------
# Single-sample kernel: exact module forward, (1, D) -> (1, 1).
# ---------------------------------------------------------------------------
def _elm_single_kernel(x_ref, w_ref, b_ref, o_ref, *, apply_relu):
    x = x_ref[...]                                   # (R, 128) f32, lane/sublane dense
    if apply_relu:                                   # ReLU chain is idempotent -> one vmax
        x = jnp.maximum(x, jnp.float32(0.0))
    acc = jnp.sum(x * w_ref[...], keepdims=True)     # (1, 1): VPU mul + XLU reduce (no MXU)
    o_ref[...] = acc + b_ref[0, 0]                   # bias: scalar read from SMEM


def ab_ranking_elm_forward(x, w_last, b_last, num_random_layers=2):
    """x: (1, D) f32; w_last: (1, D) f32; b_last: (1, 1) f32 -> (1, 1) f32."""
    assert x.ndim == 2 and x.shape[0] == 1
    D = x.shape[1]
    assert w_last.shape == (1, D)
    assert b_last.shape == (1, 1)

    # Pad feature dim to a multiple of 128 lanes. Zero-padding is exact:
    # relu(0) * 0 == 0 contributes nothing to the sum.
    Dp = ((D + 127) // 128) * 128
    if Dp != D:
        x = jnp.pad(x, ((0, 0), (0, Dp - D)))
        w_last = jnp.pad(w_last, ((0, 0), (0, Dp - D)))
    R = Dp // 128
    x2 = x.reshape(R, 128)           # wrapper-side reshape: dense vreg packing
    w2 = w_last.reshape(R, 128)
    b = b_last.astype(jnp.float32)

    kernel = functools.partial(_elm_single_kernel, apply_relu=num_random_layers > 0)
    return pl.pallas_call(
        kernel,
        out_shape=jax.ShapeDtypeStruct((1, 1), jnp.float32),
        in_specs=[
            pl.BlockSpec((R, 128), lambda: (0, 0)),               # x tile
            pl.BlockSpec((R, 128), lambda: (0, 0)),               # last-layer weight tile
            pl.BlockSpec(memory_space=pltpu.MemorySpace.SMEM),    # bias scalar in SMEM
        ],
        out_specs=pl.BlockSpec((1, 1), lambda: (0, 0)),
    )(x2, w2, b)


# ---------------------------------------------------------------------------
# Batched variant: same math applied row-wise, launch cost amortized.
# Samples live on lanes (lane-dense (1, B) output), features on sublanes.
# ---------------------------------------------------------------------------
def _elm_batched_kernel(xt_ref, w_ref, b_ref, o_ref, *, apply_relu):
    x = xt_ref[...]                                  # (D, TB): features x samples
    if apply_relu:
        x = jnp.maximum(x, jnp.float32(0.0))
    # Per-sample weighted sum; reducing over sublanes keeps the result lane-dense,
    # so the (1, TB) store is an unmasked vst.
    o_ref[...] = jnp.sum(x * w_ref[...], axis=0, keepdims=True) + b_ref[0, 0]


def ab_ranking_elm_forward_batched(xb, w_last, b_last, num_random_layers=2, tile_b=128):
    """xb: (B, D) f32 with B % tile_b == 0 -> (B, 1) f32 (row i == forward(xb[i:i+1]))."""
    B, D = xb.shape
    assert w_last.shape == (1, D) and b_last.shape == (1, 1)
    assert tile_b % 128 == 0 and B % tile_b == 0

    xt = xb.T                        # (D, B): layout plumbing done outside the kernel
    wt = w_last.reshape(D, 1)
    b = b_last.astype(jnp.float32)

    kernel = functools.partial(_elm_batched_kernel, apply_relu=num_random_layers > 0)
    out_row = pl.pallas_call(
        kernel,
        out_shape=jax.ShapeDtypeStruct((1, B), jnp.float32),
        grid=(B // tile_b,),
        in_specs=[
            pl.BlockSpec((D, tile_b), lambda i: (0, i)),          # tile of samples
            pl.BlockSpec((D, 1), lambda i: (0, 0)),               # weights, resident
            pl.BlockSpec(memory_space=pltpu.MemorySpace.SMEM),    # bias scalar in SMEM
        ],
        out_specs=pl.BlockSpec((1, tile_b), lambda i: (0, i)),    # lane-dense output slab
        compiler_params=pltpu.CompilerParams(
            dimension_semantics=("parallel",)),                   # 2 TCs on v7x shard batch
    )(xt, wt, b)
    return out_row.T                 # (B, 1)


if __name__ == "__main__":
    INPUTS_SHAPE = 512
    NUM_RANDOM_LAYERS = 2
    BATCH = 256

    key = jax.random.PRNGKey(0)
    kx, kw, kb, kr, kbx = jax.random.split(key, 5)

    x = jax.random.normal(kx, (1, INPUTS_SHAPE), dtype=jnp.float32)
    w_last = jax.random.normal(kw, (1, INPUTS_SHAPE), dtype=jnp.float32) * 0.05
    b_last = jax.random.normal(kb, (1, 1), dtype=jnp.float32) * 0.05
    # rand_weights of the ReLU "random layers" exist in __init__ but never participate
    # in forward; materialized here only for fidelity with the PyTorch module.
    _unused_rand_weights = jax.random.normal(
        kr, (NUM_RANDOM_LAYERS, INPUTS_SHAPE), dtype=jnp.float32
    )

    # --- single-sample path: exact module forward semantics, (1, D) -> (1, 1) ---
    out = jax.block_until_ready(
        ab_ranking_elm_forward(x, w_last, b_last, NUM_RANDOM_LAYERS)
    )
    xr = x
    for _ in range(NUM_RANDOM_LAYERS):
        xr = jnp.maximum(xr, 0.0)
    ref = xr @ w_last.T + b_last
    assert out.shape == (1, 1)
    assert jnp.allclose(out, ref, atol=1e-4, rtol=1e-4)

    # --- batched path: same math over many samples, pallas_call overhead amortized ---
    xb = jax.random.normal(kbx, (BATCH, INPUTS_SHAPE), dtype=jnp.float32)
    outb = jax.block_until_ready(
        ab_ranking_elm_forward_batched(xb, w_last, b_last, NUM_RANDOM_LAYERS)
    )
    refb = jnp.maximum(xb, 0.0) @ w_last.T + b_last
    assert outb.shape == (BATCH, 1)
    assert jnp.allclose(outb, refb, atol=1e-4, rtol=1e-4)

    print("KERNEL_OK")
</pallas_src>

<mosaic_0001>
module attributes {stable_mosaic.version = 11 : i64} {
  func.func @_elm_single_kernel(%arg0: memref<4x128xf32, #tpu.memory_space<vmem>>, %arg1: memref<4x128xf32, #tpu.memory_space<vmem>>, %arg2: memref<1x1xf32, #tpu.memory_space<smem>>, %arg3: memref<1x1xf32, #tpu.memory_space<vmem>>) attributes {dimension_semantics = [], scalar_prefetch = 0 : i64, scratch_operands = 0 : i64, tpu.core_type = #tpu.core_type<tc>} {
    %c0 = arith.constant 0 : index
    %c0_0 = arith.constant 0 : index
    %0 = vector.load %arg0[%c0, %c0_0] : memref<4x128xf32, #tpu.memory_space<vmem>>, vector<4x128xf32>
    %cst = arith.constant 0.000000e+00 : f32
    %1 = vector.broadcast %cst : f32 to vector<4x128xf32>
    %2 = arith.maximumf %0, %1 : vector<4x128xf32>
    %c0_1 = arith.constant 0 : index
    %c0_2 = arith.constant 0 : index
    %3 = vector.load %arg1[%c0_1, %c0_2] : memref<4x128xf32, #tpu.memory_space<vmem>>, vector<4x128xf32>
    %4 = arith.mulf %2, %3 : vector<4x128xf32>
    %5 = vector.shape_cast %4 : vector<4x128xf32> to vector<1x4x128xf32>
    %cst_3 = arith.constant dense<0.000000e+00> : vector<1xf32>
    %6 = vector.multi_reduction <add>, %5, %cst_3 [1, 2] : vector<1x4x128xf32> to vector<1xf32>
    %7 = vector.shape_cast %6 : vector<1xf32> to vector<1x1x1xf32>
    %8 = vector.extract %7[0, 0, 0] : f32 from vector<1x1x1xf32>
    %9 = vector.broadcast %8 : f32 to vector<1x1xf32>
    %c0_4 = arith.constant 0 : index
    %c0_5 = arith.constant 0 : index
    %10 = memref.load %arg2[%c0_4, %c0_5] : memref<1x1xf32, #tpu.memory_space<smem>>
    %11 = vector.broadcast %10 : f32 to vector<1x1xf32>
    %12 = arith.addf %9, %11 : vector<1x1xf32>
    %c0_6 = arith.constant 0 : index
    %c0_7 = arith.constant 0 : index
    %13 = vector.load %arg3[%c0_6, %c0_7] : memref<1x1xf32, #tpu.memory_space<vmem>>, vector<1x1xf32>
    tpu.vector_store %arg3[%c0_6, %c0_7], %12 {strides = array<i32>} : memref<1x1xf32, #tpu.memory_space<vmem>>, vector<1x1xf32>,
    return
  }
}

</mosaic_0001>

<llo_original>
// kernel: tpu_custom_call.1
$region0: #{tpu_custom_call.1}
  #allocation0 [shape = 'u32[]', space=smem, size = 0x4, offset = 0x4, fixed_abs, tag = 'smem constant byte address 0x4 - core index']
  #allocation1 [shape = 'u32[144,128]{1,0:T(1,128)}', space=vmem, size = 0x12000, scoped, tag = 'internal scratch']
  #allocation2 [shape = 'f32[1,1]{1,0:T(1,128)S(6)}', space=smem, size = 0x200, scoped, tag = 'scoped memory for tpu_custom_call.1']
  %s0 = inlined_call_operand.hbm [shape: f32[4,128], index: 0, kind: input, shape index: {}]
  %s1 = inlined_call_operand.vmem [shape: f32[4,128], index: 1, kind: input, shape index: {}]
  %s2 = inlined_call_operand.<no memory space> [shape: f32[1,1], index: 2, kind: input, shape index: {}]
  %s3 = inlined_call_operand.hbm [shape: f32[1,1], index: 3, kind: output, shape index: {}]
  %s4 = sld [smem:[#allocation0]]
  $region26: #{tpu_custom_call.1} parent=0
    _
  %s6 = ssub.s32 1, %s4
  %s7 = scalar_select 0, %s6, %s4
  %8 = sst [smem:[#allocation2]] %s2
  $region1: #{tpu_custom_call.1} parent=0
    #allocation3 [shape = 'u8[2048]{0}', space=vmem, size = 0x800, scoped, tag = 'input window, operand 0, single buffered']
    #allocation4 [shape = 's32[1]{0}', space=sflag, size = 0x4, scoped, tag = 'scoped memory for tpu_custom_call.1']
    #allocation5 [shape = 's32[1]{0}', space=sflag, size = 0x4, scoped, tag = 'scoped memory for tpu_custom_call.1']
    #allocation6 [shape = 'u8[512]{0}', space=vmem, size = 0x400, scoped, tag = 'output window, operand 0, single buffered']
    %9 = vsyncpa [#allocation4], 0
    %10 = vsyncpa [#allocation5], 0
    // Predicated region
    $region2: #{tpu_custom_call.1} parent=1 // pred_check
      _
    $region3: #{tpu_custom_call.1} parent=1 // pred_check_branch
      %12 = sbr.rel (0) target = $region5
    $region4: #{tpu_custom_call.1} parent=1 // pred_region
      %s14 = ssub.s32 64, 64
      %15 = vsyncadd [#allocation4], %s14
      %s17 = sshll.u32 [#allocation3], 4
      %s18 = int_to_ptr.vmem [resolvable:$true] %s17
      %20 = dma.hbm_to_vmem [thread:$0]  %s0, 64, %s18, [#allocation4]
    $region5: #{tpu_custom_call.1} parent=1 // pred_fallthru
      _
    // Predicated region
    $region6: #{tpu_custom_call.1} parent=1 // pred_check
      _
    $region7: #{tpu_custom_call.1} parent=1 // pred_check_branch
      %22 = sbr.rel (0) target = $region9
    $region8: #{tpu_custom_call.1} parent=1 // pred_region
      _
    $region9: #{tpu_custom_call.1} parent=1 // pred_fallthru
      _
    // Predicated region
    $region10: #{tpu_custom_call.1} parent=1 // pred_check
      _
    $region11: #{tpu_custom_call.1} parent=1 // pred_check_branch
      %24 = sbr.rel (0) target = $region13
    $region12: #{tpu_custom_call.1} parent=1 // pred_region
      _
    $region13: #{tpu_custom_call.1} parent=1 // pred_fallthru
      _
    // Predicated region
    $region14: #{tpu_custom_call.1} parent=1 // pred_check
      _
    $region15: #{tpu_custom_call.1} parent=1 // pred_check_branch
      %26 = sbr.rel (0) target = $region17
    $region16: #{tpu_custom_call.1} parent=1 // pred_region
      %27 = dma.done [#allocation4], 64
    $region17: #{tpu_custom_call.1} parent=1 // pred_fallthru
      _
    %v28 = vld [vmem:[#allocation3] sm:$0xf]
    %v29 = vmax.f32 %v28, 0.0
    %v30 = vld [vmem:[%s1] sm:$0xf]
    %v31 = vmul.f32 %v29, %v30
    %vm32 = vcmask 1043456
    %v33 = vsel %vm32, %v31, 0.0
    %34 = vadd.xlane.f32.xlu0 %v33
    %v35 = vpop.xlane.xlu0 %34
    %v36 = vrot.slane %v35, 4
    %v37 = vadd.f32 %v35, %v36
    %v38 = vrot.slane %v37, 2
    %v39 = vadd.f32 %v37, %v38
    %v40 = vrot.slane %v39, 1
    %v41 = vadd.f32 %v39, %v40
    %s42 = vtos %v41
    %v43 = vstv %s42
    %s44 = sld [smem:[#allocation2]]
    %v45 = vstv %s44
    %v46 = vadd.f32 %v43, %v45
    %vm47 = vcmask 0
    %48 = vst.msk [vmem:[#allocation6] sm:$0x1] %vm47, %v46
    // Predicated region
    $region18: #{tpu_custom_call.1} parent=1 // pred_check
      _
    $region19: #{tpu_custom_call.1} parent=1 // pred_check_branch
      %50 = sbr.rel (0) target = $region21
    $region20: #{tpu_custom_call.1} parent=1 // pred_region
      %s52 = ssub.s32 16, 16
      %53 = vsyncadd [#allocation5], %s52
      %s55 = sshll.u32 [#allocation6], 4
      %s56 = int_to_ptr.vmem [resolvable:$true] %s55
      %58 = dma.vmem_to_hbm [thread:$0]  %s56, 16, %s3, [#allocation5]
    $region21: #{tpu_custom_call.1} parent=1 // pred_fallthru
      _
    // Predicated region
    $region22: #{tpu_custom_call.1} parent=1 // pred_check
      _
    $region23: #{tpu_custom_call.1} parent=1 // pred_check_branch
      %60 = sbr.rel (0) target = $region25
    $region24: #{tpu_custom_call.1} parent=1 // pred_region
      %61 = dma.done [#allocation5], 16
    $region25: #{tpu_custom_call.1} parent=1 // pred_fallthru
      _
    %62 = vsyncpa [#allocation4], 1
    %63 = vsyncpa [#allocation5], 1

</llo_original>
